<compile_context>
chip_gen: v5e
topology: v5e:2x2
jax: 0.10.0
libtpu: 0.0.40
codegen_flags: <defaults>
</compile_context>

<pallas_src>
import functools

import jax
import jax.numpy as jnp
from jax import lax
from jax.experimental import pallas as pl
from jax.experimental.pallas import tpu as pltpu

PI = 3.141592653589793
_PI_2 = 1.5707963267948966
_PI_4 = 0.7853981633974483
_TAN_PI_8 = 0.4142135623730950
_TAN_3PI_8 = 2.414213562373095


def _pick_tile(n, max_tile):
    """Row tile along the negative-sample axis.

    Full array if small; otherwise a divisor that is a multiple of 128 so the
    lane-dense (1, 1, tile) score block obeys the (8, 128) layout rule.
    Falls back to a single full block otherwise.
    """
    if n <= max_tile:
        return n
    for t in (512, 256, 128):
        if t <= max_tile and n % t == 0:
            return t
    return n


# --------------------------------------------------------------------------
# atan / atan2 built from VPU ops only (mul/add/div/select).  Mosaic's atan2
# lowering is not reliably available across versions, so we use a Cephes-style
# single-precision polynomial (max error ~1e-6 rad) to keep the whole rec path
# fused in one kernel.
# --------------------------------------------------------------------------
def _atan_pos(x):
    big = x > _TAN_3PI_8
    mid = jnp.logical_and(x > _TAN_PI_8, jnp.logical_not(big))
    x_big = -1.0 / jnp.where(big, x, 1.0)
    x_mid = (x - 1.0) / (x + 1.0)
    xr = jnp.where(big, x_big, jnp.where(mid, x_mid, x))
    offs = jnp.where(big, _PI_2, jnp.where(mid, _PI_4, 0.0))
    z = xr * xr
    p = ((8.05374449538e-2 * z - 1.38776856032e-1) * z + 1.99777106478e-1) * z \
        - 3.33329491539e-1
    return offs + xr + xr * z * p


def _atan2(y, x):
    ax = jnp.abs(x)
    ay = jnp.abs(y)
    denom = jnp.where(ax == 0.0, 1.0, ax)
    t = _atan_pos(ay / denom)                       # first-quadrant atan(|y|/|x|)
    t = jnp.where(ax == 0.0, _PI_2, t)
    r = jnp.where(x >= 0.0, t, PI - t)
    r = jnp.where(y >= 0.0, r, -r)
    r = jnp.where(y == 0.0, jnp.where(x < 0.0, PI, 0.0), r)
    return r


# --------------------------------------------------------------------------
# Kernel 1: RotatE scoring (is_rec=False).  Grid = (batch, item-tile).
# Inputs arrive pre-split into lane-dense re/im halves of width H.
# --------------------------------------------------------------------------
def _rotate_kernel(re_h_ref, im_h_ref, rel_ref, re_t_ref, im_t_ref, out_ref, *,
                   gamma, phase_scale, head_batch):
    phase = rel_ref[...] * phase_scale            # (1, 1, H)
    re_r = jnp.cos(phase)
    im_r = jnp.sin(phase)

    re_h = re_h_ref[...]
    im_h = im_h_ref[...]
    re_t = re_t_ref[...]
    im_t = im_t_ref[...]

    if head_batch:
        re_s = re_r * re_t + im_r * im_t - re_h
        im_s = re_r * im_t - im_r * re_t - im_h
    else:
        re_s = re_h * re_r - im_h * im_r - re_t
        im_s = re_h * im_r + im_h * re_r - im_t

    dist = jnp.sqrt(re_s * re_s + im_s * im_s)    # (1, tn, H)
    # lane-dense (1, 1, tn) output slab
    out_ref[...] = (gamma - jnp.sum(dist, axis=-1))[:, None, :]


def rotate_pallas(re_head, im_head, relation, re_tail, im_tail,
                  gamma, emb_range, mode):
    b, nh, h = re_head.shape
    nt = re_tail.shape[1]
    n = max(nh, nt)
    tn = _pick_tile(n, 512)

    def bn_spec(nx):
        if nx == 1:
            return pl.BlockSpec((1, 1, h), lambda i, j: (i, 0, 0))
        return pl.BlockSpec((1, tn, h), lambda i, j: (i, j, 0))

    kernel = functools.partial(
        _rotate_kernel, gamma=float(gamma),
        phase_scale=float(PI / float(emb_range)),
        head_batch=(mode == 'head-batch'))

    out = pl.pallas_call(
        kernel,
        out_shape=jax.ShapeDtypeStruct((b, 1, n), jnp.float32),
        grid=(b, n // tn),
        in_specs=[bn_spec(nh), bn_spec(nh), bn_spec(1), bn_spec(nt), bn_spec(nt)],
        out_specs=pl.BlockSpec((1, 1, tn), lambda i, j: (i, 0, j)),
        compiler_params=pltpu.CompilerParams(
            dimension_semantics=("parallel", "parallel"),
            vmem_limit_bytes=32 * 1024 * 1024),
    )(re_head, im_head, relation, re_tail, im_tail)
    return out.reshape(b, n)


# --------------------------------------------------------------------------
# Kernel 2 (fully fused rec path, is_rec=True):
#   object = user + entity + item  (re/im stacked -> one logits matmul)
#   + host-supplied Gumbel noise, hard one-hot of argmax
#   preference = one_hot @ relation_phase (single stacked MXU pass)
#   score = gamma - || atan2(head) + atan2(pref) - atan2(tail) ||_1
# --------------------------------------------------------------------------
def _rec_kernel(re_u_ref, im_u_ref, re_e_ref, im_e_ref,
                re_i_ref, im_i_ref, g_re_ref, g_im_ref, relph_ref, out_ref, *,
                gamma):
    re_u = re_u_ref[...]            # (1, 1, H)
    im_u = im_u_ref[...]
    re_e = re_e_ref[...]            # (1, 1, H)
    im_e = im_e_ref[...]
    re_i = re_i_ref[...]            # (1, tn, H)
    im_i = im_i_ref[...]
    relph = relph_ref[...]          # (R, H)

    tn = re_i.shape[1]
    h = relph.shape[1]
    r = relph.shape[0]

    re_obj = (re_u + re_e + re_i).reshape(tn, h)
    im_obj = (im_u + im_e + im_i).reshape(tn, h)
    obj = jnp.concatenate([re_obj, im_obj], axis=0)          # (2*tn, H)

    dn = (((1,), (1,)), ((), ()))                            # obj @ relph^T
    logits = lax.dot_general(obj, relph, dn,
                             preferred_element_type=jnp.float32)  # (2*tn, R)

    # Gumbel(0, 1) noise (precomputed on host, tiny) -> perturbed logits.
    g_re = g_re_ref[...].reshape(tn, r)
    g_im = g_im_ref[...].reshape(tn, r)
    y = logits + jnp.concatenate([g_re, g_im], axis=0)       # (2*tn, R)

    # Hard one-hot of argmax (forward value of F.gumbel_softmax(hard=True)).
    m = jnp.max(y, axis=-1, keepdims=True)
    iota_r = lax.broadcasted_iota(jnp.int32, y.shape, 1)
    cand = jnp.where(y == m, iota_r, r)
    first = jnp.min(cand, axis=-1, keepdims=True)
    onehot = (iota_r == first).astype(jnp.float32)           # (2*tn, R)

    pref = jnp.dot(onehot, relph, preferred_element_type=jnp.float32)  # (2*tn, H)
    re_pref = pref[:tn].reshape(1, tn, h)
    im_pref = pref[tn:].reshape(1, tn, h)

    pref_phase = _atan2(im_pref, re_pref)                    # (1, tn, H)
    head_phase = _atan2(im_u, re_u)                          # (1, 1, H)
    tail_phase = _atan2(im_e + im_i, re_e + re_i)            # (1, tn, H)

    score = head_phase + pref_phase - tail_phase
    out_ref[...] = (gamma - jnp.sum(jnp.abs(score), axis=-1))[:, None, :]


def complex_recommendation_pallas(re_user, im_user, re_ent, im_ent,
                                  re_item, im_item, rel_phase,
                                  gumbel_re, gumbel_im, gamma):
    b, n, h = re_item.shape
    r = rel_phase.shape[0]
    tn = _pick_tile(n, 256)

    fixed_spec = pl.BlockSpec((1, 1, h), lambda i, j: (i, 0, 0))
    item_spec = pl.BlockSpec((1, tn, h), lambda i, j: (i, j, 0))
    noise_spec = pl.BlockSpec((1, tn, r), lambda i, j: (i, j, 0))
    rel_spec = pl.BlockSpec((r, h), lambda i, j: (0, 0))

    kernel = functools.partial(_rec_kernel, gamma=float(gamma))
    out = pl.pallas_call(
        kernel,
        out_shape=jax.ShapeDtypeStruct((b, 1, n), jnp.float32),
        grid=(b, n // tn),
        in_specs=[fixed_spec, fixed_spec, fixed_spec, fixed_spec,
                  item_spec, item_spec, noise_spec, noise_spec, rel_spec],
        out_specs=pl.BlockSpec((1, 1, tn), lambda i, j: (i, 0, j)),
        compiler_params=pltpu.CompilerParams(
            dimension_semantics=("parallel", "parallel"),
            vmem_limit_bytes=32 * 1024 * 1024),
    )(re_user, im_user, re_ent, im_ent, re_item, im_item,
      gumbel_re, gumbel_im, rel_phase)
    return out.reshape(b, n)


# --------------------------------------------------------------------------
# Embedding gathers (index_select) kept in XLA glue, identical to the module.
# --------------------------------------------------------------------------
def _gather_kg(embs, sample, mode):
    if mode == 'single':
        s = sample
        head = jnp.take(embs[3], s[:, 0], axis=0)[:, None, :]
        relation = jnp.take(embs[4], s[:, 1], axis=0)[:, None, :]
        tail = jnp.take(embs[3], s[:, 2], axis=0)[:, None, :]
    elif mode == 'head-batch':
        tail_part, head_part = sample
        b, n = head_part.shape
        head = jnp.take(embs[3], head_part.reshape(-1), axis=0).reshape(b, n, -1)
        relation = jnp.take(embs[4], tail_part[:, 1], axis=0)[:, None, :]
        tail = jnp.take(embs[3], tail_part[:, 2], axis=0)[:, None, :]
    elif mode == 'tail-batch':
        head_part, tail_part = sample
        b, n = tail_part.shape
        head = jnp.take(embs[3], head_part[:, 0], axis=0)[:, None, :]
        relation = jnp.take(embs[4], head_part[:, 1], axis=0)[:, None, :]
        tail = jnp.take(embs[3], tail_part.reshape(-1), axis=0).reshape(b, n, -1)
    else:
        raise ValueError('mode %s not supported' % mode)
    return head, relation, tail


def _gather_rec(embs, sample, mode):
    if mode == 'single':
        s = sample
        user = jnp.take(embs[0], s[:, 0], axis=0)[:, None, :]
        item = jnp.take(embs[1], s[:, 2], axis=0)[:, None, :]
        entity = jnp.take(embs[3], s[:, 2], axis=0)[:, None, :]
    elif mode == 'tail-batch':
        head_part, tail_part = sample
        b, n = tail_part.shape
        user = jnp.take(embs[0], head_part[:, 0], axis=0)[:, None, :]
        item = jnp.take(embs[1], tail_part.reshape(-1), axis=0).reshape(b, n, -1)
        entity = jnp.take(embs[3], head_part[:, 2], axis=0)[:, None, :]
    else:
        raise ValueError('mode %s not supported' % mode)
    return user, item, entity


def _gumbel_noise(key, b, n, r):
    # Matches F.gumbel_softmax's Gumbel(0, 1) noise distributionally.
    # TODO(synk): exact bit-for-bit parity with torch's RNG is not reproducible.
    g = jax.random.gumbel(key, (2, b, n, r), dtype=jnp.float32)
    return g[0], g[1]


def rtransup_forward(params, sample, is_rec, mode, key=None):
    embs = params['embeddings']
    gamma = params['gamma']
    emb_range = params['embedding_range']
    h = embs[2].shape[1]           # hidden_dim (relation dim)

    if is_rec:
        user, item, entity = _gather_rec(embs, sample, mode)
        rel_phase = (embs[2] + embs[4]) * (PI / float(emb_range))
        if key is None:
            key = jax.random.PRNGKey(0)
        b, n = item.shape[0], item.shape[1]
        g_re, g_im = _gumbel_noise(key, b, n, rel_phase.shape[0])
        return complex_recommendation_pallas(
            user[..., :h], user[..., h:],
            entity[..., :h], entity[..., h:],
            item[..., :h], item[..., h:],
            rel_phase, g_re, g_im, gamma)

    head, relation, tail = _gather_kg(embs, sample, mode)
    return rotate_pallas(head[..., :h], head[..., h:], relation,
                         tail[..., :h], tail[..., h:], gamma, emb_range, mode)


# --------------------------------------------------------------------------
# Pure-JAX references (correctness checks).
# --------------------------------------------------------------------------
def _rotate_reference(head, relation, tail, gamma, emb_range, mode):
    h = relation.shape[-1]
    re_h, im_h = head[..., :h], head[..., h:]
    re_t, im_t = tail[..., :h], tail[..., h:]
    phase = relation * (PI / float(emb_range))
    re_r, im_r = jnp.cos(phase), jnp.sin(phase)
    if mode == 'head-batch':
        re_s = re_r * re_t + im_r * im_t - re_h
        im_s = re_r * im_t - im_r * re_t - im_h
    else:
        re_s = re_h * re_r - im_h * im_r - re_t
        im_s = re_h * im_r + im_h * re_r - im_t
    dist = jnp.sqrt(re_s * re_s + im_s * im_s)
    return float(gamma) - jnp.sum(dist, axis=2)


def _rec_reference(user, item, entity, rel_phase, g_re, g_im, gamma):
    h = rel_phase.shape[1]
    re_u, im_u = user[..., :h], user[..., h:]
    re_e, im_e = entity[..., :h], entity[..., h:]
    re_i, im_i = item[..., :h], item[..., h:]
    re_obj = re_u + re_e + re_i
    im_obj = im_u + im_e + im_i
    re_logit = jnp.einsum('bnh,rh->bnr', re_obj, rel_phase)
    im_logit = jnp.einsum('bnh,rh->bnr', im_obj, rel_phase)
    re_idx = jnp.argmax(re_logit + g_re, axis=-1)
    im_idx = jnp.argmax(im_logit + g_im, axis=-1)
    re_pref = rel_phase[re_idx]
    im_pref = rel_phase[im_idx]
    pref_phase = jnp.arctan2(im_pref, re_pref)
    head_phase = jnp.arctan2(im_u, re_u)
    tail_phase = jnp.arctan2(im_e + im_i, re_e + re_i)
    score = head_phase + pref_phase - tail_phase
    return float(gamma) - jnp.sum(jnp.abs(score), axis=-1)


if __name__ == "__main__":
    key = jax.random.PRNGKey(0)

    # arg_counts = [nuser, nrating, nitem, nrelation, nentity]
    nuser, nrating, nitem, nrelation, nentity = 8, 3, 10, 6, 12
    hidden_dim = 16
    gamma = 12.0
    epsilon = 2.0
    entity_dim = hidden_dim * 2
    relation_dim = hidden_dim
    emb_range = (gamma + epsilon) / hidden_dim

    sizes = [(nuser, entity_dim), (nitem, entity_dim), (nrelation, relation_dim),
             (nentity, entity_dim), (nrelation, relation_dim)]
    key, *ekeys = jax.random.split(key, len(sizes) + 1)
    embeddings = [jax.random.uniform(k, s, jnp.float32, -emb_range, emb_range)
                  for k, s in zip(ekeys, sizes)]
    params = dict(embeddings=embeddings, gamma=gamma, embedding_range=emb_range)

    batch, n_neg = 2, 4
    key, k1, k2, k3, k4, k5, k6, kg = jax.random.split(key, 8)

    # recommendation sample: positive triples (user, rating, item) + neg items
    rec_head = jnp.stack([
        jax.random.randint(k1, (batch,), 0, nuser),
        jax.random.randint(k1, (batch,), 0, nrating),
        jax.random.randint(k2, (batch,), 0, min(nitem, nentity)),
    ], axis=1)
    rec_tail = jax.random.randint(k2, (batch, n_neg), 0, nitem)

    # KG sample: positive triples (head, relation, tail) + negative entities
    kg_pos = jnp.stack([
        jax.random.randint(k3, (batch,), 0, nentity),
        jax.random.randint(k3, (batch,), 0, nrelation),
        jax.random.randint(k4, (batch,), 0, nentity),
    ], axis=1)
    kg_neg = jax.random.randint(k4, (batch, n_neg), 0, nentity)

    # --- deterministic RotatE path: compare against plain-JAX reference ---
    for sample, mode in ((kg_pos, 'single'),
                         ((kg_pos, kg_neg), 'tail-batch'),
                         ((kg_pos, kg_neg), 'head-batch')):
        got = jax.block_until_ready(rtransup_forward(params, sample, False, mode))
        head, relation, tail = _gather_kg(embeddings, sample, mode)
        want = _rotate_reference(head, relation, tail, gamma, emb_range, mode)
        assert got.shape == want.shape
        assert bool(jnp.allclose(got, want, rtol=5e-3, atol=5e-3)), mode
        assert bool(jnp.all(jnp.isfinite(got)))

    # --- in-kernel atan2 approximation sanity (outside the kernel, same code) ---
    xs = jax.random.normal(k5, (128,), jnp.float32)
    ys = jax.random.normal(k6, (128,), jnp.float32)
    atan_err = jnp.max(jnp.abs(_atan2(ys, xs) - jnp.arctan2(ys, xs)))
    assert bool(atan_err < 1e-4)

    # --- stochastic recommendation path: compare against plain-JAX reference
    #     built from the SAME (deterministic, key-derived) Gumbel noise. ---
    for sample, mode in (((rec_head, rec_tail), 'tail-batch'),
                         (rec_head, 'single')):
        rec_score = jax.block_until_ready(
            rtransup_forward(params, sample, True, mode, key=kg))
        user, item, entity = _gather_rec(embeddings, sample, mode)
        rel_phase = (embeddings[2] + embeddings[4]) * (PI / float(emb_range))
        g_re, g_im = _gumbel_noise(kg, item.shape[0], item.shape[1],
                                   rel_phase.shape[0])
        want = _rec_reference(user, item, entity, rel_phase, g_re, g_im, gamma)
        assert rec_score.shape == want.shape, mode
        assert bool(jnp.all(jnp.isfinite(rec_score)))
        assert bool(jnp.allclose(rec_score, want, rtol=1e-2, atol=1e-2)), mode
        # scores bounded by gamma +/- 3*pi per hidden dim of the L1 phase norm
        assert bool(jnp.all(jnp.abs(rec_score - gamma) <= 3.0 * PI * hidden_dim))

    print("KERNEL_OK")
</pallas_src>

<mosaic_0001>
module attributes {stable_mosaic.version = 11 : i64} {
  func.func @_rotate_kernel(%arg0: i32, %arg1: i32, %arg2: memref<1x1x16xf32, #tpu.memory_space<vmem>>, %arg3: memref<1x1x16xf32, #tpu.memory_space<vmem>>, %arg4: memref<1x1x16xf32, #tpu.memory_space<vmem>>, %arg5: memref<1x1x16xf32, #tpu.memory_space<vmem>>, %arg6: memref<1x1x16xf32, #tpu.memory_space<vmem>>, %arg7: memref<1x1x1xf32, #tpu.memory_space<vmem>>) attributes {dimension_semantics = [#tpu.dimension_semantics<parallel>, #tpu.dimension_semantics<parallel>], iteration_bounds = array<i64: 2, 1>, scalar_prefetch = 0 : i64, scratch_operands = 0 : i64, tpu.core_type = #tpu.core_type<tc>, window_params = [{transform_indices = @transform_0, window_bounds = array<i64: 1, 1, 16>}, {transform_indices = @transform_1, window_bounds = array<i64: 1, 1, 16>}, {transform_indices = @transform_2, window_bounds = array<i64: 1, 1, 16>}, {transform_indices = @transform_3, window_bounds = array<i64: 1, 1, 16>}, {transform_indices = @transform_4, window_bounds = array<i64: 1, 1, 16>}, {transform_indices = @transform_5, window_bounds = array<i64: 1, 1, 1>}]} {
    %c0 = arith.constant 0 : index
    %c0_0 = arith.constant 0 : index
    %c0_1 = arith.constant 0 : index
    %0 = vector.load %arg4[%c0, %c0_0, %c0_1] : memref<1x1x16xf32, #tpu.memory_space<vmem>>, vector<1x1x16xf32>
    %cst = arith.constant 3.59039164 : f32
    %1 = vector.broadcast %cst : f32 to vector<1x1x16xf32>
    %2 = arith.mulf %0, %1 : vector<1x1x16xf32>
    %3 = math.cos %2 : vector<1x1x16xf32>
    %4 = math.sin %2 : vector<1x1x16xf32>
    %c0_2 = arith.constant 0 : index
    %c0_3 = arith.constant 0 : index
    %c0_4 = arith.constant 0 : index
    %5 = vector.load %arg2[%c0_2, %c0_3, %c0_4] : memref<1x1x16xf32, #tpu.memory_space<vmem>>, vector<1x1x16xf32>
    %c0_5 = arith.constant 0 : index
    %c0_6 = arith.constant 0 : index
    %c0_7 = arith.constant 0 : index
    %6 = vector.load %arg3[%c0_5, %c0_6, %c0_7] : memref<1x1x16xf32, #tpu.memory_space<vmem>>, vector<1x1x16xf32>
    %c0_8 = arith.constant 0 : index
    %c0_9 = arith.constant 0 : index
    %c0_10 = arith.constant 0 : index
    %7 = vector.load %arg5[%c0_8, %c0_9, %c0_10] : memref<1x1x16xf32, #tpu.memory_space<vmem>>, vector<1x1x16xf32>
    %c0_11 = arith.constant 0 : index
    %c0_12 = arith.constant 0 : index
    %c0_13 = arith.constant 0 : index
    %8 = vector.load %arg6[%c0_11, %c0_12, %c0_13] : memref<1x1x16xf32, #tpu.memory_space<vmem>>, vector<1x1x16xf32>
    %9 = arith.mulf %5, %3 : vector<1x1x16xf32>
    %10 = arith.mulf %6, %4 : vector<1x1x16xf32>
    %11 = arith.subf %9, %10 : vector<1x1x16xf32>
    %12 = arith.subf %11, %7 : vector<1x1x16xf32>
    %13 = arith.mulf %5, %4 : vector<1x1x16xf32>
    %14 = arith.mulf %6, %3 : vector<1x1x16xf32>
    %15 = arith.addf %13, %14 : vector<1x1x16xf32>
    %16 = arith.subf %15, %8 : vector<1x1x16xf32>
    %17 = arith.mulf %12, %12 : vector<1x1x16xf32>
    %18 = arith.mulf %16, %16 : vector<1x1x16xf32>
    %19 = arith.addf %17, %18 : vector<1x1x16xf32>
    %20 = math.sqrt %19 : vector<1x1x16xf32>
    %cst_14 = arith.constant dense<0.000000e+00> : vector<1x1xf32>
    %21 = vector.multi_reduction <add>, %20, %cst_14 [2] : vector<1x1x16xf32> to vector<1x1xf32>
    %cst_15 = arith.constant 1.200000e+01 : f32
    %22 = vector.broadcast %cst_15 : f32 to vector<1x1xf32>
    %23 = arith.subf %22, %21 : vector<1x1xf32>
    %24 = vector.shape_cast %23 : vector<1x1xf32> to vector<1x1x1xf32>
    %c0_16 = arith.constant 0 : index
    %c0_17 = arith.constant 0 : index
    %c0_18 = arith.constant 0 : index
    %25 = vector.load %arg7[%c0_16, %c0_17, %c0_18] : memref<1x1x1xf32, #tpu.memory_space<vmem>>, vector<1x1x1xf32>
    tpu.vector_store %arg7[%c0_16, %c0_17, %c0_18], %24 {strides = array<i32>} : memref<1x1x1xf32, #tpu.memory_space<vmem>>, vector<1x1x1xf32>,
    return
  }
  func.func @transform_0(%arg0: i32, %arg1: i32) -> (i32, i32, i32) {
    %c0_i32 = arith.constant 0 : i32
    %c0_i32_0 = arith.constant 0 : i32
    %c0_i32_1 = arith.constant 0 : i32
    return %arg0, %c0_i32, %c0_i32_0 : i32, i32, i32
  }
  func.func @transform_1(%arg0: i32, %arg1: i32) -> (i32, i32, i32) {
    %c0_i32 = arith.constant 0 : i32
    %c0_i32_0 = arith.constant 0 : i32
    %c0_i32_1 = arith.constant 0 : i32
    return %arg0, %c0_i32, %c0_i32_0 : i32, i32, i32
  }
  func.func @transform_2(%arg0: i32, %arg1: i32) -> (i32, i32, i32) {
    %c0_i32 = arith.constant 0 : i32
    %c0_i32_0 = arith.constant 0 : i32
    %c0_i32_1 = arith.constant 0 : i32
    return %arg0, %c0_i32, %c0_i32_0 : i32, i32, i32
  }
  func.func @transform_3(%arg0: i32, %arg1: i32) -> (i32, i32, i32) {
    %c0_i32 = arith.constant 0 : i32
    %c0_i32_0 = arith.constant 0 : i32
    %c0_i32_1 = arith.constant 0 : i32
    return %arg0, %c0_i32, %c0_i32_0 : i32, i32, i32
  }
  func.func @transform_4(%arg0: i32, %arg1: i32) -> (i32, i32, i32) {
    %c0_i32 = arith.constant 0 : i32
    %c0_i32_0 = arith.constant 0 : i32
    %c0_i32_1 = arith.constant 0 : i32
    return %arg0, %c0_i32, %c0_i32_0 : i32, i32, i32
  }
  func.func @transform_5(%arg0: i32, %arg1: i32) -> (i32, i32, i32) {
    %c0_i32 = arith.constant 0 : i32
    %c0_i32_0 = arith.constant 0 : i32
    return %arg0, %c0_i32, %arg1 : i32, i32, i32
  }
}

</mosaic_0001>

<llo_original>
// kernel: tpu_custom_call.1
$region0: #{tpu_custom_call.1}
  #allocation0 [shape = 'u32[]', space=smem, size = 0x4, offset = 0x4, fixed_abs, tag = 'smem constant byte address 0x4 - core index']
  #allocation1 [shape = 'u32[72,128]{1,0:T(1,128)}', space=vmem, size = 0x9000, scoped, tag = 'internal scratch']
  %s0 = inlined_call_operand.hbm [shape: f32[2,1,16], index: 0, kind: input, shape index: {}]
  %s1 = inlined_call_operand.hbm [shape: f32[2,1,16], index: 1, kind: input, shape index: {}]
  %s2 = inlined_call_operand.hbm [shape: f32[2,1,16], index: 2, kind: input, shape index: {}]
  %s3 = inlined_call_operand.vmem [shape: f32[2,1,16], index: 3, kind: input, shape index: {}]
  %s4 = inlined_call_operand.hbm [shape: f32[2,1,16], index: 4, kind: input, shape index: {}]
  %s5 = inlined_call_operand.vmem [shape: f32[2,1,1], index: 5, kind: output, shape index: {}]
  %s6 = sld [smem:[#allocation0]]
  $region69: #{tpu_custom_call.1} parent=0
    _
  %s8 = ssub.s32 1, %s6
  %s9 = scalar_select 0, %s8, %s6
  $region1: #{tpu_custom_call.1} parent=0
    #allocation2 [shape = 'u8[1024]{0}', space=vmem, size = 0x400, scoped, tag = 'input window, operand 0']
    #allocation3 [shape = 's32[2]{0}', space=sflag, size = 0x8, scoped, tag = 'scoped memory for tpu_custom_call.1']
    #allocation4 [shape = 'u8[1024]{0}', space=vmem, size = 0x400, scoped, tag = 'input window, operand 1']
    #allocation5 [shape = 's32[2]{0}', space=sflag, size = 0x8, scoped, tag = 'scoped memory for tpu_custom_call.1']
    #allocation6 [shape = 'u8[1024]{0}', space=vmem, size = 0x400, scoped, tag = 'input window, operand 2']
    #allocation7 [shape = 'u8[1024]{0}', space=vmem, size = 0x400, scoped, tag = 'input window, operand 4']
    #allocation8 [shape = 's32[2]{0}', space=sflag, size = 0x8, scoped, tag = 'scoped memory for tpu_custom_call.1']
    %10 = vsyncpa [#allocation3], 0
    %s11 = scalar_lea.sflag [#allocation3], 1
    %12 = vsyncpa %s11, 0
    %13 = vsyncpa [#allocation5], 0
    %s14 = scalar_lea.sflag [#allocation5], 1
    %15 = vsyncpa %s14, 0
    %16 = vsyncpa [#allocation8], 0
    %s17 = scalar_lea.sflag [#allocation8], 1
    %18 = vsyncpa %s17, 0
    loop: start=0, step=1, limit=4
    $region2: #{tpu_custom_call.1} parent=1 // loop_pre_header
      _
    $region3: #{tpu_custom_call.1} parent=1 // loop_header
      %s20 = sphi 0, %s24
      %p21 = scmp.ge.s32.totalorder %s20, 4
      %s27 = sphi 0, %s39
      %s28 = sphi 0, %s35
      %s29 = sphi 0, %s27
      %s30 = sphi 0, %s28
      %s31 = sphi 0, %s29
      %s32 = sphi 0, %s30
      %s42 = sphi 0, %s44
      %s45 = sphi 0, %s42
      %s46 = sphi 0, %s45
      %s62 = sphi 0, %s46
      %s68 = sphi 0, %s70
      %s71 = sphi 0, %s68
      %s72 = sphi 0, %s71
      %s88 = sphi 0, %s72
      %s94 = sphi 0, %s96
      %s97 = sphi 0, %s94
      %s98 = sphi 0, %s97
      %s114 = sphi 0, %s98
      %s120 = sphi 0, %s122
      %s123 = sphi 0, %s120
      %s124 = sphi 0, %s123
      %s140 = sphi 0, %s124
      %s146 = sphi 0, %s148
      %s149 = sphi 0, %s146
      %s150 = sphi 0, %s149
      %s166 = sphi 0, %s150
      %s174 = sphi 0, %s176
      %s177 = sphi 0, %s174
      %s178 = sphi 0, %s177
      %s194 = sphi 0, %s178
    $region4: #{tpu_custom_call.1} parent=1 // loop_header_branch
      %23 = sbr.rel (%p21) target = $region8
    $region5: #{tpu_custom_call.1} parent=1 // loop_body
      %s25 = ssub.s32 %s20, 1
      %s26 = ssub.s32 %s20, 2
      %s33 = sadd.s32 1, %s28
      %p34 = scmp.ge.s32.totalorder %s33, 1
      %s35 = scalar_select %p34, 0, %s33
      %s36 = sadd.s32 1, %s27
      %s37 = scalar_select %p34, %s36, %s27
      %p38 = scmp.ge.s32.totalorder %s37, 2
      %s39 = scalar_select %p38, 0, %s37
      %s40 = ssub.s32 %s27, %s39
      %p41 = scmp.eq.s32.totalorder %s40, 0
      %s43 = sadd.s32 %s42, 1
      %s44 = scalar_select %p41, %s42, %s43
      %p47 = pneg %p41
      %p48 = scmp.eq.s32.totalorder %s20, 1
      %p49 = por %p47, %p48
      %p50 = scmp.ne.s32.totalorder %s42, %s45
      %p51 = scmp.eq.s32.totalorder %s20, 0
      %p52 = por %p50, %p51
      %p53 = scmp.ne.s32.totalorder %s42, %s45
      %p54 = scmp.eq.s32.totalorder %s25, 1
      %p55 = por %p53, %p54
      %p56 = scmp.ne.s32.totalorder %s45, %s46
      %p57 = scmp.eq.s32.totalorder %s25, 0
      %p58 = por %p56, %p57
      %p59 = scmp.ne.s32.totalorder %s45, %s46
      %p60 = scmp.eq.s32.totalorder %s26, 1
      %p61 = por %p59, %p60
      %p63 = scmp.ne.s32.totalorder %s46, %s62
      %p64 = scmp.eq.s32.totalorder %s26, 0
      %p65 = por %p63, %p64
      %s66 = ssub.s32 %s27, %s39
      %p67 = scmp.eq.s32.totalorder %s66, 0
      %s69 = sadd.s32 %s68, 1
      %s70 = scalar_select %p67, %s68, %s69
      %p73 = pneg %p67
      %p74 = scmp.eq.s32.totalorder %s20, 1
      %p75 = por %p73, %p74
      %p76 = scmp.ne.s32.totalorder %s68, %s71
      %p77 = scmp.eq.s32.totalorder %s20, 0
      %p78 = por %p76, %p77
      %p79 = scmp.ne.s32.totalorder %s68, %s71
      %p80 = scmp.eq.s32.totalorder %s25, 1
      %p81 = por %p79, %p80
      %p82 = scmp.ne.s32.totalorder %s71, %s72
      %p83 = scmp.eq.s32.totalorder %s25, 0
      %p84 = por %p82, %p83
      %p85 = scmp.ne.s32.totalorder %s71, %s72
      %p86 = scmp.eq.s32.totalorder %s26, 1
      %p87 = por %p85, %p86
      %p89 = scmp.ne.s32.totalorder %s72, %s88
      %p90 = scmp.eq.s32.totalorder %s26, 0
      %p91 = por %p89, %p90
      %s92 = ssub.s32 %s27, %s39
      %p93 = scmp.eq.s32.totalorder %s92, 0
      %s95 = sadd.s32 %s94, 1
      %s96 = scalar_select %p93, %s94, %s95
      %p99 = pneg %p93
      %p100 = scmp.eq.s32.totalorder %s20, 1
      %p101 = por %p99, %p100
      %p102 = scmp.ne.s32.totalorder %s94, %s97
      %p103 = scmp.eq.s32.totalorder %s20, 0
      %p104 = por %p102, %p103
      %p105 = scmp.ne.s32.totalorder %s94, %s97
      %p106 = scmp.eq.s32.totalorder %s25, 1
      %p107 = por %p105, %p106
      %p108 = scmp.ne.s32.totalorder %s97, %s98
      %p109 = scmp.eq.s32.totalorder %s25, 0
      %p110 = por %p108, %p109
      %p111 = scmp.ne.s32.totalorder %s97, %s98
      %p112 = scmp.eq.s32.totalorder %s26, 1
      %p113 = por %p111, %p112
      %p115 = scmp.ne.s32.totalorder %s98, %s114
      %p116 = scmp.eq.s32.totalorder %s26, 0
      %p117 = por %p115, %p116
      %s118 = ssub.s32 %s27, %s39
      %p119 = scmp.eq.s32.totalorder %s118, 0
      %s121 = sadd.s32 %s120, 1
      %s122 = scalar_select %p119, %s120, %s121
      %p125 = pneg %p119
      %p126 = scmp.eq.s32.totalorder %s20, 1
      %p127 = por %p125, %p126
      %p128 = scmp.ne.s32.totalorder %s120, %s123
      %p129 = scmp.eq.s32.totalorder %s20, 0
      %p130 = por %p128, %p129
      %p131 = scmp.ne.s32.totalorder %s120, %s123
      %p132 = scmp.eq.s32.totalorder %s25, 1
      %p133 = por %p131, %p132
      %p134 = scmp.ne.s32.totalorder %s123, %s124
      %p135 = scmp.eq.s32.totalorder %s25, 0
      %p136 = por %p134, %p135
      %p137 = scmp.ne.s32.totalorder %s123, %s124
      %p138 = scmp.eq.s32.totalorder %s26, 1
      %p139 = por %p137, %p138
      %p141 = scmp.ne.s32.totalorder %s124, %s140
      %p142 = scmp.eq.s32.totalorder %s26, 0
      %p143 = por %p141, %p142
      %s144 = ssub.s32 %s27, %s39
      %p145 = scmp.eq.s32.totalorder %s144, 0
      %s147 = sadd.s32 %s146, 1
      %s148 = scalar_select %p145, %s146, %s147
      %p151 = pneg %p145
      %p152 = scmp.eq.s32.totalorder %s20, 1
      %p153 = por %p151, %p152
      %p154 = scmp.ne.s32.totalorder %s146, %s149
      %p155 = scmp.eq.s32.totalorder %s20, 0
      %p156 = por %p154, %p155
      %p157 = scmp.ne.s32.totalorder %s146, %s149
      %p158 = scmp.eq.s32.totalorder %s25, 1
      %p159 = por %p157, %p158
      %p160 = scmp.ne.s32.totalorder %s149, %s150
      %p161 = scmp.eq.s32.totalorder %s25, 0
      %p162 = por %p160, %p161
      %p163 = scmp.ne.s32.totalorder %s149, %s150
      %p164 = scmp.eq.s32.totalorder %s26, 1
      %p165 = por %p163, %p164
      %p167 = scmp.ne.s32.totalorder %s150, %s166
      %p168 = scmp.eq.s32.totalorder %s26, 0
      %p169 = por %p167, %p168
      %s170 = ssub.s32 %s27, %s39
      %s171 = ssub.s32 %s28, %s35
      %s172 = sor.u32 %s170, %s171
      %p173 = scmp.eq.s32.totalorder %s172, 0
      %s175 = sadd.s32 %s174, 1
      %s176 = scalar_select %p173, %s174, %s175
      %p179 = pneg %p173
      %p180 = scmp.eq.s32.totalorder %s20, 1
      %p181 = por %p179, %p180
      %p182 = scmp.ne.s32.totalorder %s174, %s177
      %p183 = scmp.eq.s32.totalorder %s20, 0
      %p184 = por %p182, %p183
      %p185 = scmp.ne.s32.totalorder %s174, %s177
      %p186 = scmp.eq.s32.totalorder %s25, 1
      %p187 = por %p185, %p186
      %p188 = scmp.ne.s32.totalorder %s177, %s178
      %p189 = scmp.eq.s32.totalorder %s25, 0
      %p190 = por %p188, %p189
      %p191 = scmp.ne.s32.totalorder %s177, %s178
      %p192 = scmp.eq.s32.totalorder %s26, 1
      %p193 = por %p191, %p192
      %p195 = scmp.ne.s32.totalorder %s178, %s194
      %p196 = scmp.eq.s32.totalorder %s26, 0
      %p197 = por %p195, %p196
      %p198 = scmp.le.s32.totalorder 1, %s20
      %p199 = scmp.lt.s32.totalorder %s20, 3
      %p200 = pnand %p198, %p199
      %p201 = pneg %p200
      // Predicated region
      $region9: #{tpu_custom_call.1} parent=5 // pred_check
        _
      $region10: #{tpu_custom_call.1} parent=5 // pred_check_branch
        %203 = sbr.rel (%p200) target = $region12
      $region11: #{tpu_custom_call.1} parent=5 // pred_region
        %s204 = ssub.s32 %s20, 1
      $region12: #{tpu_custom_call.1} parent=5 // pred_fallthru
        _
      %p205 = scmp.lt.s32.totalorder %s20, 2
      // Predicated region
      $region13: #{tpu_custom_call.1} parent=5 // pred_check
        %p206 = pneg %p205
      $region14: #{tpu_custom_call.1} parent=5 // pred_check_branch
        %208 = sbr.rel (%p206) target = $region16
      $region15: #{tpu_custom_call.1} parent=5 // pred_region
        // Predicated region
        $region17: #{tpu_custom_call.1} parent=15 // pred_check
          %p209 = pneg %p52
        $region18: #{tpu_custom_call.1} parent=15 // pred_check_branch
          %211 = sbr.rel (%p209) target = $region20
        $region19: #{tpu_custom_call.1} parent=15 // pred_region
          %s212 = sand.u32 %s42, 1
          %s213 = scalar_lea.sflag [#allocation3], %s212
          %s214 = sand.u32 %s42, 1
          %s215 = scalar_lea.vmem [#allocation2], %s214
          %217 = vsyncadd %s213, 0
          %s218 = scalar_lea.hbm %s0, %s27
          %s220 = sshll.u32 %s218, 4
          %s221 = int_to_ptr.hbm [resolvable:$true] %s220
          %s222 = sshll.u32 %s215, 4
          %s223 = int_to_ptr.vmem [resolvable:$true] %s222
          %225 = dma.hbm_to_vmem [thread:$0]  %s221, 16, %s223, %s213
        $region20: #{tpu_custom_call.1} parent=15 // pred_fallthru
          _
        // Predicated region
        $region21: #{tpu_custom_call.1} parent=15 // pred_check
          %p226 = pneg %p78
        $region22: #{tpu_custom_call.1} parent=15 // pred_check_branch
          %228 = sbr.rel (%p226) target = $region24
        $region23: #{tpu_custom_call.1} parent=15 // pred_region
          %s229 = sand.u32 %s20, 1
          %s230 = scalar_lea.sflag [#allocation5], %s229
          %s231 = sand.u32 %s68, 1
          %s232 = scalar_lea.vmem [#allocation4], %s231
          %234 = vsyncadd %s230, 0
          %s235 = scalar_lea.hbm %s1, %s27
          %s237 = sshll.u32 %s235, 4
          %s238 = int_to_ptr.hbm [resolvable:$true] %s237
          %s239 = sshll.u32 %s232, 4
          %s240 = int_to_ptr.vmem [resolvable:$true] %s239
          %242 = dma.hbm_to_vmem [thread:$0]  %s238, 16, %s240, %s230
        $region24: #{tpu_custom_call.1} parent=15 // pred_fallthru
          _
        // Predicated region
        $region25: #{tpu_custom_call.1} parent=15 // pred_check
          %p243 = pneg %p104
        $region26: #{tpu_custom_call.1} parent=15 // pred_check_branch
          %245 = sbr.rel (%p243) target = $region28
        $region27: #{tpu_custom_call.1} parent=15 // pred_region
          %s246 = sand.u32 %s20, 1
          %s247 = scalar_lea.sflag [#allocation5], %s246
          %s248 = sand.u32 %s94, 1
          %s249 = scalar_lea.vmem [#allocation6], %s248
          %251 = vsyncadd %s247, 0
          %s252 = scalar_lea.hbm %s2, %s27
          %s254 = sshll.u32 %s252, 4
          %s255 = int_to_ptr.hbm [resolvable:$true] %s254
          %s256 = sshll.u32 %s249, 4
          %s257 = int_to_ptr.vmem [resolvable:$true] %s256
          %259 = dma.hbm_to_vmem [thread:$0]  %s255, 16, %s257, %s247
        $region28: #{tpu_custom_call.1} parent=15 // pred_fallthru
          _
        // Predicated region
        $region29: #{tpu_custom_call.1} parent=15 // pred_check
          %p260 = pneg %p130
        $region30: #{tpu_custom_call.1} parent=15 // pred_check_branch
          %262 = sbr.rel (%p260) target = $region32
        $region31: #{tpu_custom_call.1} parent=15 // pred_region
          %p263 = scmp.lt.s32.totalorder %s27, 1
          %s264 = scalar_select %p263, %s27, 1
          %s265 = scalar_lea.vmem %s3, %s264
        $region32: #{tpu_custom_call.1} parent=15 // pred_fallthru
          _
        // Predicated region
        $region33: #{tpu_custom_call.1} parent=15 // pred_check
          %p266 = pneg %p156
        $region34: #{tpu_custom_call.1} parent=15 // pred_check_branch
          %268 = sbr.rel (%p266) target = $region36
        $region35: #{tpu_custom_call.1} parent=15 // pred_region
          %s269 = sand.u32 %s146, 1
          %s270 = scalar_lea.sflag [#allocation8], %s269
          %s271 = sand.u32 %s146, 1
          %s272 = scalar_lea.vmem [#allocation7], %s271
          %274 = vsyncadd %s270, 0
          %s275 = scalar_lea.hbm %s4, %s27
          %s277 = sshll.u32 %s275, 4
          %s278 = int_to_ptr.hbm [resolvable:$true] %s277
          %s279 = sshll.u32 %s272, 4
          %s280 = int_to_ptr.vmem [resolvable:$true] %s279
          %282 = dma.hbm_to_vmem [thread:$0]  %s278, 16, %s280, %s270
        $region36: #{tpu_custom_call.1} parent=15 // pred_fallthru
          _
      $region16: #{tpu_custom_call.1} parent=5 // pred_fallthru
        _
      %p283 = scmp.le.s32.totalorder 1, %s20
      %p284 = scmp.lt.s32.totalorder %s20, 3
      %p285 = pnand %p283, %p284
      %p286 = pneg %p285
      // Predicated region
      $region37: #{tpu_custom_call.1} parent=5 // pred_check
        _
      $region38: #{tpu_custom_call.1} parent=5 // pred_check_branch
        %288 = sbr.rel (%p285) target = $region40
      $region39: #{tpu_custom_call.1} parent=5 // pred_region
        %s289 = ssub.s32 %s20, 1
        %s290 = sand.u32 %s45, 1
        %s291 = scalar_lea.sflag [#allocation3], %s290
        %s292 = sand.u32 %s45, 1
        %s293 = scalar_lea.vmem [#allocation2], %s292
        // Predicated region
        $region41: #{tpu_custom_call.1} parent=39 // pred_check
          %p294 = pneg %p58
        $region42: #{tpu_custom_call.1} parent=39 // pred_check_branch
          %296 = sbr.rel (%p294) target = $region44
        $region43: #{tpu_custom_call.1} parent=39 // pred_region
          %298 = dma.done %s291, 16
        $region44: #{tpu_custom_call.1} parent=39 // pred_fallthru
          _
        %s299 = sand.u32 %s25, 1
        %s300 = scalar_lea.sflag [#allocation5], %s299
        %s301 = sand.u32 %s71, 1
        %s302 = scalar_lea.vmem [#allocation4], %s301
        // Predicated region
        $region45: #{tpu_custom_call.1} parent=39 // pred_check
          %p303 = pneg %p84
        $region46: #{tpu_custom_call.1} parent=39 // pred_check_branch
          %305 = sbr.rel (%p303) target = $region48
        $region47: #{tpu_custom_call.1} parent=39 // pred_region
          %307 = dma.done %s300, 16
        $region48: #{tpu_custom_call.1} parent=39 // pred_fallthru
          _
        %s308 = sand.u32 %s25, 1
        %s309 = scalar_lea.sflag [#allocation5], %s308
        %s310 = sand.u32 %s97, 1
        %s311 = scalar_lea.vmem [#allocation6], %s310
        // Predicated region
        $region49: #{tpu_custom_call.1} parent=39 // pred_check
          %p312 = pneg %p110
        $region50: #{tpu_custom_call.1} parent=39 // pred_check_branch
          %314 = sbr.rel (%p312) target = $region52
        $region51: #{tpu_custom_call.1} parent=39 // pred_region
          %316 = dma.done %s309, 16
        $region52: #{tpu_custom_call.1} parent=39 // pred_fallthru
          _
        %s317 = sand.u32 %s149, 1
        %s318 = scalar_lea.sflag [#allocation8], %s317
        %s319 = sand.u32 %s149, 1
        %s320 = scalar_lea.vmem [#allocation7], %s319
        // Predicated region
        $region53: #{tpu_custom_call.1} parent=39 // pred_check
          %p321 = pneg %p162
        $region54: #{tpu_custom_call.1} parent=39 // pred_check_branch
          %323 = sbr.rel (%p321) target = $region56
        $region55: #{tpu_custom_call.1} parent=39 // pred_region
          %325 = dma.done %s318, 16
        $region56: #{tpu_custom_call.1} parent=39 // pred_fallthru
          _
        %s326 = sand.u32 %s45, 1
        %s327 = scalar_lea.sflag [#allocation3], %s326
        %s328 = sand.u32 %s45, 1
        %s329 = scalar_lea.vmem [#allocation2], %s328
        %p330 = pneg %p58
        %p331 = pneg %p55
        %s332 = sand.u32 %s25, 1
        %s333 = scalar_lea.sflag [#allocation5], %s332
        %s334 = sand.u32 %s71, 1
        %s335 = scalar_lea.vmem [#allocation4], %s334
        %p336 = pneg %p84
        %p337 = pneg %p81
        %s338 = sand.u32 %s25, 1
        %s339 = scalar_lea.sflag [#allocation5], %s338
        %s340 = sand.u32 %s97, 1
        %s341 = scalar_lea.vmem [#allocation6], %s340
        %p342 = pneg %p110
        %p343 = pneg %p107
        %p344 = scmp.lt.s32.totalorder %s29, 1
        %s345 = scalar_select %p344, %s29, 1
        %s346 = scalar_lea.vmem %s3, %s345
        %p347 = pneg %p136
        %p348 = pneg %p133
        %s349 = sand.u32 %s149, 1
        %s350 = scalar_lea.sflag [#allocation8], %s349
        %s351 = sand.u32 %s149, 1
        %s352 = scalar_lea.vmem [#allocation7], %s351
        %p353 = pneg %p162
        %p354 = pneg %p159
        %p355 = pneg %p190
        %p356 = pneg %p187
        %p357 = scmp.lt.s32.totalorder %s29, 1
        %s358 = scalar_select %p357, %s29, 1
        %p359 = scmp.lt.s32.totalorder %s30, 0
        %s360 = scalar_select %p359, %s30, 0
        %s361 = sadd.s32 %s360, %s358
        %s362 = scalar_lea.vmem %s5, %s361
        %p363 = scmp.lt.s32.totalorder %s29, 1
        %s364 = scalar_select %p363, %s29, 1
        %s365 = scalar_lea.vmem %s3, %s364
        %p366 = scmp.lt.s32.totalorder %s29, 1
        %s367 = scalar_select %p366, %s29, 1
        %p368 = scmp.lt.s32.totalorder %s30, 0
        %s369 = scalar_select %p368, %s30, 0
        %s370 = sadd.s32 %s369, %s367
        %s371 = scalar_lea.vmem %s5, %s370
        %v372 = vld [vmem:[%s311] sm:$0x1]
        %v373 = vmul.f32 %v372, 3.5903916
        %v374 = vand.u32 2147483647, %v373
        %vm375 = vcmp.le.f32.partialorder %v374, 0.7853982
        %vm376 = vcmp.lt.s32.totalorder %v373, 0
        %v377 = vand.u32 %v373, 2139095040
        %v378 = vshrl.u32 %v377, 23
        %v379 = vsub.s32 %v378, 127
        %v380 = vand.u32 2147483647, %v373
        %v381 = vand.u32 %v380, 8388607
        %v382 = vor.u32 %v381, 8388608
        %v383 = vsub.s32 0, %v382
        %v384 = vadd.s32 %v379, 1
        %vm385 = vcmp.gt.s32.totalorder %v384, 0
        %v386 = vsel %vm385, %v384, 0
        %v387 = vshrl.u32 %v386, 5
        %v388 = vand.u32 %v386, 31
        %v389 = vsub.s32 32, %v388
        %v390 = vshrl.u32 683565275, %v389
        %v391 = vshll.u32 683565275, %v388
        %v392 = vshrl.u32 2475754826, %v389
        %v393 = vor.u32 %v391, %v392
        %v394 = vshll.u32 2475754826, %v388
        %v395 = vshrl.u32 2131351028, %v389
        %v396 = vor.u32 %v394, %v395
        %v397 = vshll.u32 2131351028, %v388
        %v398 = vshrl.u32 2102212464, %v389
        %v399 = vor.u32 %v397, %v398
        %v400 = vshll.u32 2102212464, %v388
        %v401 = vshrl.u32 920167782, %v389
        %v402 = vor.u32 %v400, %v401
        %v403 = vshll.u32 920167782, %v388
        %v404 = vshrl.u32 1326507024, %v389
        %v405 = vor.u32 %v403, %v404
        %vm406 = vcmp.lt.s32.totalorder %v387, 1
        %vm407 = vcmp.lt.s32.totalorder %v387, 2
        %vm408 = vcmp.lt.s32.totalorder %v387, 3
        %vm409 = vcmp.lt.s32.totalorder %v387, 4
        %v410 = vsel %vm406, %v390, %v393
        %v411 = vsel %vm409, %v399, 2102212464
        %v412 = vsel %vm408, %v396, %v411
        %v413 = vsel %vm407, %v410, %v412
        %v414 = vsel %vm406, %v393, %v396
        %v415 = vsel %vm409, %v402, 920167782
        %v416 = vsel %vm408, %v399, %v415
        %v417 = vsel %vm407, %v414, %v416
        %v418 = vsel %vm406, %v396, %v399
        %v419 = vsel %vm409, %v405, 1326507024
        %v420 = vsel %vm408, %v402, %v419
        %v421 = vsel %vm407, %v418, %v420
        %v422 = vshll.u32 %v382, 8
        %v423 = vand.u32 %v422, 65535
        %v424 = vshrl.u32 %v422, 16
        %v425 = vand.u32 %v421, 65535
        %v426 = vshrl.u32 %v421, 16
        %v427 = vmul.u32 %v423, %v425
        %v428 = vmul.u32 %v423, %v426
        %v429 = vmul.u32 %v424, %v425
        %v430 = vmul.u32 %v424, %v426
        %v431 = vshll.u32 %v428, 16
        %v432 = vshrl.u32 %v428, 16
        %v433 = vshll.u32 %v429, 16
        %v434 = vshrl.u32 %v429, 16
        %vm435 = vc.u32 %v427, %v431
        %v436 = vsel %vm435, 1, 0
        %v437 = vadd.s32 %v427, %v431
        %v438 = vadd.s32 %v430, %v436
        %vm439 = vc.u32 %v437, %v433
        %v440 = vsel %vm439, 1, 0
        %v441 = vadd.s32 %v437, %v433
        %v442 = vadd.s32 %v438, %v440
        %v443 = vadd.s32 %v442, %v432
        %v444 = vadd.s32 %v443, %v434
        %v445 = vand.u32 %v422, 65535
        %v446 = vshrl.u32 %v422, 16
        %v447 = vand.u32 %v417, 65535
        %v448 = vshrl.u32 %v417, 16
        %v449 = vmul.u32 %v445, %v447
        %v450 = vmul.u32 %v445, %v448
        %v451 = vmul.u32 %v446, %v447
        %v452 = vmul.u32 %v446, %v448
        %v453 = vshll.u32 %v450, 16
        %v454 = vshrl.u32 %v450, 16
        %v455 = vshll.u32 %v451, 16
        %v456 = vshrl.u32 %v451, 16
        %vm457 = vc.u32 %v449, %v453
        %v458 = vsel %vm457, 1, 0
        %v459 = vadd.s32 %v449, %v453
        %v460 = vadd.s32 %v452, %v458
        %vm461 = vc.u32 %v459, %v455
        %v462 = vsel %vm461, 1, 0
        %v463 = vadd.s32 %v459, %v455
        %v464 = vadd.s32 %v460, %v462
        %v465 = vadd.s32 %v464, %v454
        %v466 = vadd.s32 %v465, %v456
        %v467 = vmul.u32 %v422, %v413
        %v468 = vadd.s32 %v444, %v463
        %vm469 = vc.u32 %v444, %v463
        %v470 = vadd.s32 %v466, 1
        %v471 = vsel %vm469, %v470, %v466
        %v472 = vadd.s32 %v467, %v471
        %v473 = vadd.s32 %v472, 536870912
        %v474 = vshrl.u32 %v473, 30
        %v475 = vshll.u32 %v474, 30
        %v476 = vsub.s32 %v472, %v475
        %vm477 = vcmp.lt.s32.totalorder %v476, 0
        %v478 = vsub.s32 0, %v476
        %v479 = vsel %vm477, %v478, %v476
        %v480 = vclz %v479
        %v481 = vsub.s32 %v480, 2
        %vm482 = vcmp.gt.s32.totalorder 0, %v481
        %v483 = vsel %vm482, 0, %v481
        %v484 = vsub.s32 32, %v483
        %v485 = vshll.u32 %v476, %v483
        %v486 = vshrl.u32 %v468, %v484
        %v487 = vor.u32 %v485, %v486
        %v488 = vsub.s32 4294967266, %v483
        %v489 = vadd.s32 %v488, 127
        %v490 = vshll.u32 %v489, 23
        %v491 = vor.u32 4788187, %v490
        %v492 = vand.u32 2147483647, %v491
        %v494 = vcvt.s32.f32 %v487
        %v495 = vmul.f32 %v494, %v492
        %v496 = vxor.u32 %v495, 2147483648
        %v497 = vsel %vm376, %v496, %v495
        %v498 = vsub.s32 4, %v474
        %v499 = vsel %vm376, %v498, %v474
        %v500 = vsel %vm375, %v373, %v497
        %v501 = vsel %vm375, 0, %v499
        %v502 = vmul.f32 %v500, %v500
        %v503 = vmul.f32 %v502, -0.001358992
        %v504 = vadd.f32 %v503, 0.041655596
        %v505 = vmul.f32 %v502, %v504
        %v506 = vadd.f32 %v505, -0.4999988
        %v507 = vmul.f32 %v502, %v506
        %v508 = vadd.f32 1.0, %v507
        %v509 = vmul.f32 %v500, %v500
        %v510 = vmul.f32 %v509, -0.00019511016
        %v511 = vadd.f32 %v510, 0.008332121
        %v512 = vmul.f32 %v509, %v511
        %v513 = vadd.f32 %v512, -0.16666654
        %v514 = vmul.f32 %v509, %v513
        %v515 = vadd.f32 %v514, 1.0
        %v516 = vmul.f32 %v515, %v500
        %vm517 = vweird.f32 %v373
        %v518 = vand.u32 %v501, 3
        %vm519 = vcmp.lt.s32.totalorder %v518, 2
        %vm520 = vcmp.eq.s32.totalorder %v518, 0
        %v521 = vxor.u32 %v516, 2147483648
        %v522 = vsel %vm520, %v508, %v521
        %vm523 = vcmp.eq.s32.totalorder %v518, 2
        %v524 = vxor.u32 %v508, 2147483648
        %v525 = vsel %vm523, %v524, %v516
        %v526 = vsel %vm519, %v522, %v525
        %v527 = vsel %vm517, nan, %v526
        %v528 = vand.u32 2147483647, %v373
        %vm529 = vcmp.le.f32.partialorder %v528, 0.7853982
        %vm530 = vcmp.lt.s32.totalorder %v373, 0
        %v531 = vand.u32 %v373, 2139095040
        %v532 = vshrl.u32 %v531, 23
        %v533 = vsub.s32 %v532, 127
        %v534 = vand.u32 2147483647, %v373
        %v535 = vand.u32 %v534, 8388607
        %v536 = vor.u32 %v535, 8388608
        %v537 = vsub.s32 0, %v536
        %v538 = vadd.s32 %v533, 1
        %vm539 = vcmp.gt.s32.totalorder %v538, 0
        %v540 = vsel %vm539, %v538, 0
        %v541 = vshrl.u32 %v540, 5
        %v542 = vand.u32 %v540, 31
        %v543 = vsub.s32 32, %v542
        %v544 = vshrl.u32 683565275, %v543
        %v545 = vshll.u32 683565275, %v542
        %v546 = vshrl.u32 2475754826, %v543
        %v547 = vor.u32 %v545, %v546
        %v548 = vshll.u32 2475754826, %v542
        %v549 = vshrl.u32 2131351028, %v543
        %v550 = vor.u32 %v548, %v549
        %v551 = vshll.u32 2131351028, %v542
        %v552 = vshrl.u32 2102212464, %v543
        %v553 = vor.u32 %v551, %v552
        %v554 = vshll.u32 2102212464, %v542
        %v555 = vshrl.u32 920167782, %v543
        %v556 = vor.u32 %v554, %v555
        %v557 = vshll.u32 920167782, %v542
        %v558 = vshrl.u32 1326507024, %v543
        %v559 = vor.u32 %v557, %v558
        %vm560 = vcmp.lt.s32.totalorder %v541, 1
        %vm561 = vcmp.lt.s32.totalorder %v541, 2
        %vm562 = vcmp.lt.s32.totalorder %v541, 3
        %vm563 = vcmp.lt.s32.totalorder %v541, 4
        %v564 = vsel %vm560, %v544, %v547
        %v565 = vsel %vm563, %v553, 2102212464
        %v566 = vsel %vm562, %v550, %v565
        %v567 = vsel %vm561, %v564, %v566
        %v568 = vsel %vm560, %v547, %v550
        %v569 = vsel %vm563, %v556, 920167782
        %v570 = vsel %vm562, %v553, %v569
        %v571 = vsel %vm561, %v568, %v570
        %v572 = vsel %vm560, %v550, %v553
        %v573 = vsel %vm563, %v559, 1326507024
        %v574 = vsel %vm562, %v556, %v573
        %v575 = vsel %vm561, %v572, %v574
        %v576 = vshll.u32 %v536, 8
        %v577 = vand.u32 %v576, 65535
        %v578 = vshrl.u32 %v576, 16
        %v579 = vand.u32 %v575, 65535
        %v580 = vshrl.u32 %v575, 16
        %v581 = vmul.u32 %v577, %v579
        %v582 = vmul.u32 %v577, %v580
        %v583 = vmul.u32 %v578, %v579
        %v584 = vmul.u32 %v578, %v580
        %v585 = vshll.u32 %v582, 16
        %v586 = vshrl.u32 %v582, 16
        %v587 = vshll.u32 %v583, 16
        %v588 = vshrl.u32 %v583, 16
        %vm589 = vc.u32 %v581, %v585
        %v590 = vsel %vm589, 1, 0
        %v591 = vadd.s32 %v581, %v585
        %v592 = vadd.s32 %v584, %v590
        %vm593 = vc.u32 %v591, %v587
        %v594 = vsel %vm593, 1, 0
        %v595 = vadd.s32 %v591, %v587
        %v596 = vadd.s32 %v592, %v594
        %v597 = vadd.s32 %v596, %v586
        %v598 = vadd.s32 %v597, %v588
        %v599 = vand.u32 %v576, 65535
        %v600 = vshrl.u32 %v576, 16
        %v601 = vand.u32 %v571, 65535
        %v602 = vshrl.u32 %v571, 16
        %v603 = vmul.u32 %v599, %v601
        %v604 = vmul.u32 %v599, %v602
        %v605 = vmul.u32 %v600, %v601
        %v606 = vmul.u32 %v600, %v602
        %v607 = vshll.u32 %v604, 16
        %v608 = vshrl.u32 %v604, 16
        %v609 = vshll.u32 %v605, 16
        %v610 = vshrl.u32 %v605, 16
        %vm611 = vc.u32 %v603, %v607
        %v612 = vsel %vm611, 1, 0
        %v613 = vadd.s32 %v603, %v607
        %v614 = vadd.s32 %v606, %v612
        %vm615 = vc.u32 %v613, %v609
        %v616 = vsel %vm615, 1, 0
        %v617 = vadd.s32 %v613, %v609
        %v618 = vadd.s32 %v614, %v616
        %v619 = vadd.s32 %v618, %v608
        %v620 = vadd.s32 %v619, %v610
        %v621 = vmul.u32 %v576, %v567
        %v622 = vadd.s32 %v598, %v617
        %vm623 = vc.u32 %v598, %v617
        %v624 = vadd.s32 %v620, 1
        %v625 = vsel %vm623, %v624, %v620
        %v626 = vadd.s32 %v621, %v625
        %v627 = vadd.s32 %v626, 536870912
        %v628 = vshrl.u32 %v627, 30
        %v629 = vshll.u32 %v628, 30
        %v630 = vsub.s32 %v626, %v629
        %vm631 = vcmp.lt.s32.totalorder %v630, 0
        %v632 = vsub.s32 0, %v630
        %v633 = vsel %vm631, %v632, %v630
        %v634 = vclz %v633
        %v635 = vsub.s32 %v634, 2
        %vm636 = vcmp.gt.s32.totalorder 0, %v635
        %v637 = vsel %vm636, 0, %v635
        %v638 = vsub.s32 32, %v637
        %v639 = vshll.u32 %v630, %v637
        %v640 = vshrl.u32 %v622, %v638
        %v641 = vor.u32 %v639, %v640
        %v642 = vsub.s32 4294967266, %v637
        %v643 = vadd.s32 %v642, 127
        %v644 = vshll.u32 %v643, 23
        %v645 = vor.u32 4788187, %v644
        %v646 = vand.u32 2147483647, %v645
        %v648 = vcvt.s32.f32 %v641
        %v649 = vmul.f32 %v648, %v646
        %v650 = vxor.u32 %v649, 2147483648
        %v651 = vsel %vm530, %v650, %v649
        %v652 = vsub.s32 4, %v628
        %v653 = vsel %vm530, %v652, %v628
        %v654 = vsel %vm529, %v373, %v651
        %v655 = vsel %vm529, 0, %v653
        %v656 = vmul.f32 %v654, %v654
        %v657 = vmul.f32 %v656, -0.001358992
        %v658 = vadd.f32 %v657, 0.041655596
        %v659 = vmul.f32 %v656, %v658
        %v660 = vadd.f32 %v659, -0.4999988
        %v661 = vmul.f32 %v656, %v660
        %v662 = vadd.f32 1.0, %v661
        %v663 = vmul.f32 %v654, %v654
        %v664 = vmul.f32 %v663, -0.00019511016
        %v665 = vadd.f32 %v664, 0.008332121
        %v666 = vmul.f32 %v663, %v665
        %v667 = vadd.f32 %v666, -0.16666654
        %v668 = vmul.f32 %v663, %v667
        %v669 = vadd.f32 %v668, 1.0
        %v670 = vmul.f32 %v669, %v654
        %vm671 = vweird.f32 %v373
        %v672 = vadd.s32 %v655, 3
        %v673 = vand.u32 %v672, 3
        %vm674 = vcmp.lt.s32.totalorder %v673, 2
        %vm675 = vcmp.eq.s32.totalorder %v673, 0
        %v676 = vxor.u32 %v670, 2147483648
        %v677 = vsel %vm675, %v662, %v676
        %vm678 = vcmp.eq.s32.totalorder %v673, 2
        %v679 = vxor.u32 %v662, 2147483648
        %v680 = vsel %vm678, %v679, %v670
        %v681 = vsel %vm674, %v677, %v680
        %v682 = vsel %vm671, nan, %v681
        %v683 = vld [vmem:[%s293] sm:$0x1]
        %v684 = vld [vmem:[%s302] sm:$0x1]
        %v685 = vld [vmem:[%s365] sm:$0x1]
        %v686 = vld [vmem:[%s320] sm:$0x1]
        %v687 = vmul.f32 %v683, %v527
        %v688 = vmul.f32 %v684, %v682
        %v689 = vsub.f32 %v687, %v688
        %v690 = vsub.f32 %v689, %v685
        %v691 = vmul.f32 %v683, %v682
        %v692 = vmul.f32 %v684, %v527
        %v693 = vadd.f32 %v691, %v692
        %v694 = vsub.f32 %v693, %v686
        %v695 = vmul.f32 %v690, %v690
        %v696 = vmul.f32 %v694, %v694
        %v697 = vadd.f32 %v695, %v696
        %v698 = vrsqrt.pop %v697
        %v699 = vmul.f32 %v698, %v697
        %v700 = vmul.f32 %v699, %v698
        %v701 = vmul.f32 0.5, %v700
        %v702 = vsub.f32 1.5, %v701
        %v703 = vmul.f32 %v698, %v702
        %v704 = vmul.f32 %v697, %v703
        %vm705 = vcmp.eq.f32.partialorder %v697, inf
        %v706 = vsel %vm705, %v697, %v704
        %vm707 = vcmp.eq.f32.partialorder %v697, 0.0
        %v708 = vand.u32 %v697, 2147483648
        %v709 = vsel %vm707, %v708, %v706
        %vm710 = vcmask 122880
        %v711 = vsel %vm710, %v709, 0.0
        %712 = vadd.xlane.f32.xlu0 %v711
        %v713 = vpop.xlane.xlu0 %712
        %v714 = vsub.f32 12.0, %v713
        %vm715 = vcmask 0
        %716 = vst.msk [vmem:[%s371] sm:$0x1] %vm715, %v714
        %p717 = scmp.lt.s32.totalorder %s29, 1
        %s718 = scalar_select %p717, %s29, 1
        %p719 = scmp.lt.s32.totalorder %s30, 0
        %s720 = scalar_select %p719, %s30, 0
        %s721 = sadd.s32 %s720, %s718
        %s722 = scalar_lea.vmem %s5, %s721
        // Predicated region
        $region57: #{tpu_custom_call.1} parent=39 // pred_check
          %p723 = pneg %p187
        $region58: #{tpu_custom_call.1} parent=39 // pred_check_branch
          %725 = sbr.rel (%p723) target = $region60
        $region59: #{tpu_custom_call.1} parent=39 // pred_region
          _
        $region60: #{tpu_custom_call.1} parent=39 // pred_fallthru
          _
      $region40: #{tpu_custom_call.1} parent=5 // pred_fallthru
        _
      %p726 = scmp.le.s32.totalorder 2, %s20
      // Predicated region
      $region61: #{tpu_custom_call.1} parent=5 // pred_check
        %p727 = pneg %p726
      $region62: #{tpu_custom_call.1} parent=5 // pred_check_branch
        %729 = sbr.rel (%p727) target = $region64
      $region63: #{tpu_custom_call.1} parent=5 // pred_region
        %s730 = ssub.s32 %s20, 2
        // Predicated region
        $region65: #{tpu_custom_call.1} parent=63 // pred_check
          %p731 = pneg %p193
        $region66: #{tpu_custom_call.1} parent=63 // pred_check_branch
          %733 = sbr.rel (%p731) target = $region68
        $region67: #{tpu_custom_call.1} parent=63 // pred_region
          %p734 = scmp.lt.s32.totalorder %s31, 1
          %s735 = scalar_select %p734, %s31, 1
          %p736 = scmp.lt.s32.totalorder %s32, 0
          %s737 = scalar_select %p736, %s32, 0
          %s738 = sadd.s32 %s737, %s735
          %s739 = scalar_lea.vmem %s5, %s738
        $region68: #{tpu_custom_call.1} parent=63 // pred_fallthru
          _
      $region64: #{tpu_custom_call.1} parent=5 // pred_fallthru
        _
    $region6: #{tpu_custom_call.1} parent=1 // loop_footer
      %s24 = sadd.s32 1, %s20
    $region7: #{tpu_custom_call.1} parent=1 // loop_footer_branch
      %19 = sbr.rel target = $region3
    $region8: #{tpu_custom_call.1} parent=1 // loop_exit
      _
    %740 = vsyncpa [#allocation3], 1
    %s741 = scalar_lea.sflag [#allocation3], 1
    %742 = vsyncpa %s741, 1
    %743 = vsyncpa [#allocation5], 1
    %s744 = scalar_lea.sflag [#allocation5], 1
    %745 = vsyncpa %s744, 1
    %746 = vsyncpa [#allocation8], 1
    %s747 = scalar_lea.sflag [#allocation8], 1
    %748 = vsyncpa %s747, 1

</llo_original>
